<compile_context>
chip_gen: v5e
topology: v5e:2x2
jax: 0.10.0
libtpu: 0.0.40
codegen_flags: <defaults>
</compile_context>

<pallas_src>
import jax
import jax.numpy as jnp
import numpy as np
from jax.experimental import pallas as pl
from jax.experimental.pallas import tpu as pltpu


def attention_kernel(enc_ref, mask_ref, dec_ref, cov_ref,
                     wh_w_ref, wh_b_ref, ws_w_ref, ws_b_ref,
                     wc_w_ref, wc_b_ref, v_w_ref, v_b_ref,
                     ctx_ref, attn_ref, cov_out_ref):
    bb, S, twoH = enc_ref.shape
    H = ws_w_ref.shape[0]

    e = enc_ref[...]        # (bb, S, 2H)  input dtype (f32 or bf16)
    mask = mask_ref[...]    # (bb, S)      f32, lane-dense
    cov = cov_ref[...]      # (bb, S)      f32, lane-dense
    dec = dec_ref[...]      # (bb, H)

    cdt = e.dtype           # MXU operand dtype follows enc_output

    # Wh(enc): one big MXU matmul over all bb*S rows (S is a multiple of 8, so
    # merging the leading dims is layout-compatible).  f32 accumulation.
    wh = jnp.dot(e.reshape(bb * S, twoH), wh_w_ref[...].astype(cdt),
                 preferred_element_type=jnp.float32).reshape(bb, S, H)

    # Ws(dec) with all three biases folded into one small (1, H) add.
    bias = wh_b_ref[...] + ws_b_ref[...] + wc_b_ref[...]              # (1, H)
    ws = jnp.dot(dec, ws_w_ref[...].astype(dec.dtype),
                 preferred_element_type=jnp.float32) + bias           # (bb, H)

    # Fused epilogue: Wc(coverage) is just a broadcasted outer product.
    t = jnp.tanh(wh + ws[:, None, :] + cov[..., None] * wc_w_ref[...])  # (bb,S,H) f32

    # V(tanh(.)): contract H -> score lands directly in the lane-dense (bb, S)
    # layout needed by the softmax.  v_b comes from SMEM.
    score = jnp.sum(t * v_w_ref[...], axis=-1) + v_b_ref[0]            # (bb, S)

    # Masked softmax over src_len (lane axis).  Large finite negative avoids
    # NaN on all-pad rows; masked terms still underflow to exactly 0.
    score = jnp.where(mask > 0.0, score, -1e30)
    m = jnp.max(score, axis=-1, keepdims=True)                         # (bb, 1)
    p = jnp.exp(score - m)                                             # (bb, S)
    denom = jnp.sum(p, axis=-1, keepdims=True)                         # (bb, 1)
    attn = p * pl.reciprocal(denom, approx=False)                      # (bb, S)

    # context = attn @ enc as a batched MXU matmul: (bb,1,S)@(bb,S,2H).
    ctx = jnp.einsum('bqs,bsd->bqd', attn[:, None, :].astype(cdt), e,
                     preferred_element_type=jnp.float32)               # (bb,1,2H)

    ctx_ref[...] = ctx[:, 0, :].astype(ctx_ref.dtype)                  # (bb, 2H)
    attn_ref[...] = attn.astype(attn_ref.dtype)                        # (bb, S)
    cov_out_ref[...] = (cov + attn).astype(cov_out_ref.dtype)          # (bb, S)


def _pick_batch_block(B, S, twoH, H, enc_elem_bytes, target_bytes=8 << 20):
    """Largest legal batch block whose per-step working set fits target_bytes,
    preferring >= 2 grid steps (v7x megacore / DMA pipelining)."""
    per_row = (2 * S * twoH * enc_elem_bytes     # double-buffered enc block
               + 3 * S * H * 4                   # f32 wh / tanh intermediates
               + 6 * S * 4)                      # mask/cov/attn rows
    cands = [d for d in range(8, B + 1, 8) if B % d == 0]
    if not cands:
        return B                                 # tiny batch: one full-batch step
    fits = [d for d in cands if d * per_row <= target_bytes]
    if fits:
        multi = [d for d in fits if B // d >= 2]
        return max(multi) if multi else max(fits)
    return min(cands)


def _vmem_limit_bytes():
    # ~3/4 of physical VMEM: ~96 MiB on v5e/v6e (128 MiB), ~48 MiB on v7x (64 MiB).
    try:
        phys = int(pltpu.get_tpu_info().vmem_capacity_bytes)
    except Exception:
        phys = 64 << 20
    return int(min(96 << 20, (phys * 3) // 4))


def attention_forward(enc_output, enc_mask, dec_hidden, coverage_vec, params,
                      *, batch_block=None):
    B, S, twoH = enc_output.shape
    H = twoH // 2
    assert S % 8 == 0, "src_len must be a multiple of 8 (free (bb*S,2H) reshape)"

    enc_bytes = jnp.dtype(enc_output.dtype).itemsize
    bb = (_pick_batch_block(B, S, twoH, H, enc_bytes)
          if batch_block is None else batch_block)
    assert B % bb == 0, "batch_block must divide B"
    assert bb % 8 == 0 or bb == B, \
        "batch_block must be a multiple of 8 (sublane rule) or equal B"

    out_dtype = enc_output.dtype
    mask2d = enc_mask[..., 0].astype(jnp.float32)        # (B, S) lane-dense
    cov2d = coverage_vec[..., 0].astype(jnp.float32)     # (B, S) lane-dense
    dec2d = dec_hidden[0]                                # (B, H)

    batched3 = lambda i: (i, 0, 0)
    batched2 = lambda i: (i, 0)
    full2 = lambda i: (0, 0)

    grid_spec = pltpu.PrefetchScalarGridSpec(
        num_scalar_prefetch=0,
        grid=(B // bb,),
        in_specs=[
            pl.BlockSpec((bb, S, twoH), batched3),          # enc_output
            pl.BlockSpec((bb, S), batched2),                # enc_mask   (lane-dense)
            pl.BlockSpec((bb, H), batched2),                # dec_hidden (B, H)
            pl.BlockSpec((bb, S), batched2),                # coverage   (lane-dense)
            pl.BlockSpec((twoH, H), full2),                 # Wh weight (in, out)
            pl.BlockSpec((1, H), full2),                    # Wh bias
            pl.BlockSpec((H, H), full2),                    # Ws weight
            pl.BlockSpec((1, H), full2),                    # Ws bias
            pl.BlockSpec((1, H), full2),                    # Wc weight (row)
            pl.BlockSpec((1, H), full2),                    # Wc bias
            pl.BlockSpec((1, H), full2),                    # V weight (out=1, in=H)
            pl.BlockSpec(memory_space=pltpu.MemorySpace.SMEM),  # V bias scalar
        ],
        out_specs=[
            pl.BlockSpec((bb, twoH), batched2),             # context   (B, 2H)
            pl.BlockSpec((bb, S), batched2),                # attn      (B, S)
            pl.BlockSpec((bb, S), batched2),                # coverage  (B, S)
        ],
    )

    out_shapes = (
        jax.ShapeDtypeStruct((B, twoH), out_dtype),
        jax.ShapeDtypeStruct((B, S), out_dtype),
        jax.ShapeDtypeStruct((B, S), out_dtype),
    )

    ctx, attn, cov_new = pl.pallas_call(
        attention_kernel,
        out_shape=out_shapes,
        grid_spec=grid_spec,
        compiler_params=pltpu.CompilerParams(
            dimension_semantics=("parallel",),
            vmem_limit_bytes=_vmem_limit_bytes()),
    )(enc_output, mask2d, dec2d, cov2d,
      params["wh_w"], params["wh_b"],
      params["ws_w"], params["ws_b"],
      params["wc_w"], params["wc_b"],
      params["v_w"], params["v_b"])

    # Restore module output shapes: coverage is (B, S, 1).
    return ctx, attn, cov_new[..., None]


def reference_forward(enc_output, enc_mask, dec_hidden, coverage_vec, p):
    """Plain-JAX replica of the PyTorch forward, for verification (f32)."""
    dec = jnp.transpose(dec_hidden, (1, 0, 2))                     # (B,1,H)
    wh = enc_output @ p["wh_w"] + p["wh_b"]                        # (B,S,H)
    ws = dec @ p["ws_w"] + p["ws_b"]                               # (B,1,H)
    wc = coverage_vec * p["wc_w"] + p["wc_b"]                      # (B,S,H)
    score = jnp.sum(jnp.tanh(wh + ws + wc) * p["v_w"],
                    axis=-1, keepdims=True) + p["v_b"][0]          # (B,S,1)
    score = jnp.where(enc_mask > 0, score, -jnp.inf)
    attn = jax.nn.softmax(score, axis=1)                           # (B,S,1)
    ctx = jnp.sum(attn * enc_output, axis=1)                       # (B,2H)
    return ctx, attn[..., 0], coverage_vec + attn


def init_params(key, hidden):
    """Deterministic init matching nn.Linear shapes (stored transposed)."""
    ks = jax.random.split(key, 8)

    def lin(kw, kb, fan_in, fan_out):
        bound = 1.0 / np.sqrt(fan_in)
        w = jax.random.uniform(kw, (fan_in, fan_out), jnp.float32, -bound, bound)
        b = jax.random.uniform(kb, (1, fan_out), jnp.float32, -bound, bound)
        return w, b

    wh_w, wh_b = lin(ks[0], ks[1], 2 * hidden, hidden)   # Wh: 2H -> H
    ws_w, ws_b = lin(ks[2], ks[3], hidden, hidden)       # Ws: H -> H
    wc_w, wc_b = lin(ks[4], ks[5], 1, hidden)            # Wc: 1 -> H  (stored (1,H))
    v_wT, v_b = lin(ks[6], ks[7], hidden, 1)             # V : H -> 1
    return {
        "wh_w": wh_w, "wh_b": wh_b,
        "ws_w": ws_w, "ws_b": ws_b,
        "wc_w": wc_w, "wc_b": wc_b,
        "v_w": jnp.transpose(v_wT),                      # (1, H)
        "v_b": v_b.reshape(1),                           # (1,)  scalar -> SMEM
    }


if __name__ == "__main__":
    # ---- small config matching the module docstring (B=2, S=8, H=32) -------
    B, S, H = 2, 8, 32
    key = jax.random.PRNGKey(0)
    k_enc, k_dec, k_cov, k_par = jax.random.split(key, 4)

    enc_output = jax.random.normal(k_enc, (B, S, 2 * H), jnp.float32)
    dec_hidden = jax.random.normal(k_dec, (1, B, H), jnp.float32)
    coverage_vec = jax.random.uniform(k_cov, (B, S, 1), jnp.float32)

    # mask: batch 0 fully valid, batch 1 has the last two positions padded
    mask_np = np.ones((B, S, 1), np.float32)
    mask_np[1, S - 2:, 0] = 0.0
    enc_mask = jnp.asarray(mask_np)

    params = init_params(k_par, H)

    ctx, attn, cov_new = attention_forward(enc_output, enc_mask, dec_hidden,
                                           coverage_vec, params)
    jax.block_until_ready((ctx, attn, cov_new))

    ctx_r, attn_r, cov_r = reference_forward(enc_output, enc_mask, dec_hidden,
                                             coverage_vec, params)
    np.testing.assert_allclose(np.asarray(ctx), np.asarray(ctx_r), rtol=1e-5, atol=1e-5)
    np.testing.assert_allclose(np.asarray(attn), np.asarray(attn_r), rtol=1e-5, atol=1e-5)
    np.testing.assert_allclose(np.asarray(cov_new), np.asarray(cov_r), rtol=1e-5, atol=1e-5)

    # ---- larger lane-dense config: exercises the multi-step tiled grid -----
    B2, S2, H2 = 16, 128, 128          # -> bb = 8, grid = (2,), 128-lane stores
    k2 = jax.random.split(jax.random.PRNGKey(1), 4)
    enc2 = jax.random.normal(k2[0], (B2, S2, 2 * H2), jnp.float32)
    dec2 = jax.random.normal(k2[1], (1, B2, H2), jnp.float32)
    cov2 = jax.random.uniform(k2[2], (B2, S2, 1), jnp.float32)
    m2 = np.ones((B2, S2, 1), np.float32)
    m2[:, S2 // 2:, :] = np.random.RandomState(0).randint(0, 2, (B2, S2 // 2, 1))
    mask2 = jnp.asarray(m2)
    params2 = init_params(k2[3], H2)

    o2 = attention_forward(enc2, mask2, dec2, cov2, params2)
    jax.block_until_ready(o2)
    r2 = reference_forward(enc2, mask2, dec2, cov2, params2)
    np.testing.assert_allclose(np.asarray(o2[0]), np.asarray(r2[0]), rtol=1e-4, atol=1e-4)
    np.testing.assert_allclose(np.asarray(o2[1]), np.asarray(r2[1]), rtol=1e-4, atol=1e-4)
    np.testing.assert_allclose(np.asarray(o2[2][..., 0]), np.asarray(r2[2][..., 0]),
                               rtol=1e-4, atol=1e-4)

    # ---- bf16 enc path (halves the HBM-bound main read); loose tolerance ----
    ctx_b, attn_b, cov_b = attention_forward(
        enc_output.astype(jnp.bfloat16), enc_mask,
        dec_hidden.astype(jnp.bfloat16), coverage_vec.astype(jnp.bfloat16), params)
    jax.block_until_ready((ctx_b, attn_b, cov_b))
    np.testing.assert_allclose(np.asarray(ctx_b.astype(jnp.float32)),
                               np.asarray(ctx_r), rtol=1e-1, atol=1e-1)

    print("KERNEL_OK")
</pallas_src>

<mosaic_0001>
module attributes {stable_mosaic.version = 11 : i64} {
  func.func @attention_kernel(%arg0: i32, %arg1: memref<2x8x64xf32, #tpu.memory_space<vmem>>, %arg2: memref<2x8xf32, #tpu.memory_space<vmem>>, %arg3: memref<2x32xf32, #tpu.memory_space<vmem>>, %arg4: memref<2x8xf32, #tpu.memory_space<vmem>>, %arg5: memref<64x32xf32, #tpu.memory_space<vmem>>, %arg6: memref<1x32xf32, #tpu.memory_space<vmem>>, %arg7: memref<32x32xf32, #tpu.memory_space<vmem>>, %arg8: memref<1x32xf32, #tpu.memory_space<vmem>>, %arg9: memref<1x32xf32, #tpu.memory_space<vmem>>, %arg10: memref<1x32xf32, #tpu.memory_space<vmem>>, %arg11: memref<1x32xf32, #tpu.memory_space<vmem>>, %arg12: memref<1xf32, #tpu.memory_space<smem>>, %arg13: memref<2x64xf32, #tpu.memory_space<vmem>>, %arg14: memref<2x8xf32, #tpu.memory_space<vmem>>, %arg15: memref<2x8xf32, #tpu.memory_space<vmem>>) attributes {dimension_semantics = [#tpu.dimension_semantics<parallel>], iteration_bounds = array<i64: 1>, scalar_prefetch = 0 : i64, scratch_operands = 0 : i64, tpu.core_type = #tpu.core_type<tc>, window_params = [{transform_indices = @transform_0, window_bounds = array<i64: 2, 8, 64>}, {transform_indices = @transform_1, window_bounds = array<i64: 2, 8>}, {transform_indices = @transform_2, window_bounds = array<i64: 2, 32>}, {transform_indices = @transform_3, window_bounds = array<i64: 2, 8>}, {pipeline_mode = #tpu.pipeline_mode<synchronous>, transform_indices = @transform_4, window_bounds = array<i64: 64, 32>}, {pipeline_mode = #tpu.pipeline_mode<synchronous>, transform_indices = @transform_5, window_bounds = array<i64: 1, 32>}, {pipeline_mode = #tpu.pipeline_mode<synchronous>, transform_indices = @transform_6, window_bounds = array<i64: 32, 32>}, {pipeline_mode = #tpu.pipeline_mode<synchronous>, transform_indices = @transform_7, window_bounds = array<i64: 1, 32>}, {pipeline_mode = #tpu.pipeline_mode<synchronous>, transform_indices = @transform_8, window_bounds = array<i64: 1, 32>}, {pipeline_mode = #tpu.pipeline_mode<synchronous>, transform_indices = @transform_9, window_bounds = array<i64: 1, 32>}, {pipeline_mode = #tpu.pipeline_mode<synchronous>, transform_indices = @transform_10, window_bounds = array<i64: 1, 32>}, {transform_indices = @transform_11, window_bounds = array<i64: 1>}, {transform_indices = @transform_12, window_bounds = array<i64: 2, 64>}, {transform_indices = @transform_13, window_bounds = array<i64: 2, 8>}, {transform_indices = @transform_14, window_bounds = array<i64: 2, 8>}]} {
    %c0 = arith.constant 0 : index
    %c0_0 = arith.constant 0 : index
    %c0_1 = arith.constant 0 : index
    %0 = vector.load %arg1[%c0, %c0_0, %c0_1] : memref<2x8x64xf32, #tpu.memory_space<vmem>>, vector<2x8x64xf32>
    %c0_2 = arith.constant 0 : index
    %c0_3 = arith.constant 0 : index
    %1 = vector.load %arg2[%c0_2, %c0_3] : memref<2x8xf32, #tpu.memory_space<vmem>>, vector<2x8xf32>
    %c0_4 = arith.constant 0 : index
    %c0_5 = arith.constant 0 : index
    %2 = vector.load %arg4[%c0_4, %c0_5] : memref<2x8xf32, #tpu.memory_space<vmem>>, vector<2x8xf32>
    %c0_6 = arith.constant 0 : index
    %c0_7 = arith.constant 0 : index
    %3 = vector.load %arg3[%c0_6, %c0_7] : memref<2x32xf32, #tpu.memory_space<vmem>>, vector<2x32xf32>
    %4 = vector.shape_cast %0 : vector<2x8x64xf32> to vector<16x64xf32>
    %c0_8 = arith.constant 0 : index
    %c0_9 = arith.constant 0 : index
    %5 = vector.load %arg5[%c0_8, %c0_9] : memref<64x32xf32, #tpu.memory_space<vmem>>, vector<64x32xf32>
    %cst = arith.constant dense<0.000000e+00> : vector<16x32xf32>
    %6 = tpu.matmul %4, %5, %cst {dimension_numbers = #tpu.dot_dimension_numbers<[1], [0], [0], [1], [0, 0, 1, 1], [], []>} : vector<16x64xf32>, vector<64x32xf32>, vector<16x32xf32> -> vector<16x32xf32>
    %7 = vector.shape_cast %6 : vector<16x32xf32> to vector<2x8x32xf32>
    %c0_10 = arith.constant 0 : index
    %c0_11 = arith.constant 0 : index
    %8 = vector.load %arg6[%c0_10, %c0_11] : memref<1x32xf32, #tpu.memory_space<vmem>>, vector<1x32xf32>
    %c0_12 = arith.constant 0 : index
    %c0_13 = arith.constant 0 : index
    %9 = vector.load %arg8[%c0_12, %c0_13] : memref<1x32xf32, #tpu.memory_space<vmem>>, vector<1x32xf32>
    %10 = arith.addf %8, %9 : vector<1x32xf32>
    %c0_14 = arith.constant 0 : index
    %c0_15 = arith.constant 0 : index
    %11 = vector.load %arg10[%c0_14, %c0_15] : memref<1x32xf32, #tpu.memory_space<vmem>>, vector<1x32xf32>
    %12 = arith.addf %10, %11 : vector<1x32xf32>
    %c0_16 = arith.constant 0 : index
    %c0_17 = arith.constant 0 : index
    %13 = vector.load %arg7[%c0_16, %c0_17] : memref<32x32xf32, #tpu.memory_space<vmem>>, vector<32x32xf32>
    %cst_18 = arith.constant dense<0.000000e+00> : vector<2x32xf32>
    %14 = tpu.matmul %3, %13, %cst_18 {dimension_numbers = #tpu.dot_dimension_numbers<[1], [0], [0], [1], [0, 0, 1, 1], [], []>} : vector<2x32xf32>, vector<32x32xf32>, vector<2x32xf32> -> vector<2x32xf32>
    %15 = vector.broadcast %12 : vector<1x32xf32> to vector<2x32xf32>
    %16 = arith.addf %14, %15 : vector<2x32xf32>
    %17 = vector.shape_cast %16 : vector<2x32xf32> to vector<2x1x32xf32>
    %18 = vector.broadcast %17 : vector<2x1x32xf32> to vector<2x8x32xf32>
    %19 = arith.addf %7, %18 : vector<2x8x32xf32>
    %20 = vector.shape_cast %2 : vector<2x8xf32> to vector<2x8x1xf32>
    %c0_19 = arith.constant 0 : index
    %c0_20 = arith.constant 0 : index
    %21 = vector.load %arg9[%c0_19, %c0_20] : memref<1x32xf32, #tpu.memory_space<vmem>>, vector<1x32xf32>
    %22 = vector.shape_cast %21 : vector<1x32xf32> to vector<1x1x32xf32>
    %23 = vector.broadcast %20 : vector<2x8x1xf32> to vector<2x8x32xf32>
    %24 = vector.broadcast %22 : vector<1x1x32xf32> to vector<2x8x32xf32>
    %25 = arith.mulf %23, %24 : vector<2x8x32xf32>
    %26 = arith.addf %19, %25 : vector<2x8x32xf32>
    %27 = math.tanh %26 : vector<2x8x32xf32>
    %c0_21 = arith.constant 0 : index
    %c0_22 = arith.constant 0 : index
    %28 = vector.load %arg11[%c0_21, %c0_22] : memref<1x32xf32, #tpu.memory_space<vmem>>, vector<1x32xf32>
    %29 = vector.shape_cast %28 : vector<1x32xf32> to vector<1x1x32xf32>
    %30 = vector.broadcast %29 : vector<1x1x32xf32> to vector<2x8x32xf32>
    %31 = arith.mulf %27, %30 : vector<2x8x32xf32>
    %cst_23 = arith.constant dense<0.000000e+00> : vector<2x8xf32>
    %32 = vector.multi_reduction <add>, %31, %cst_23 [2] : vector<2x8x32xf32> to vector<2x8xf32>
    %c0_24 = arith.constant 0 : index
    %33 = memref.load %arg12[%c0_24] : memref<1xf32, #tpu.memory_space<smem>>
    %34 = vector.broadcast %33 : f32 to vector<2x8xf32>
    %35 = arith.addf %32, %34 : vector<2x8xf32>
    %cst_25 = arith.constant 0.000000e+00 : f32
    %36 = vector.broadcast %cst_25 : f32 to vector<2x8xf32>
    %37 = arith.cmpf ogt, %1, %36 : vector<2x8xf32>
    %cst_26 = arith.constant -1.000000e+30 : f32
    %38 = vector.broadcast %cst_26 : f32 to vector<2x8xf32>
    %39 = arith.select %37, %35, %38 : vector<2x8xi1>, vector<2x8xf32>
    %cst_27 = arith.constant dense<0xFF800000> : vector<2xf32>
    %40 = vector.multi_reduction <maximumf>, %39, %cst_27 [1] : vector<2x8xf32> to vector<2xf32>
    %41 = vector.shape_cast %40 : vector<2xf32> to vector<2x1xf32>
    %42 = vector.broadcast %41 : vector<2x1xf32> to vector<2x8xf32>
    %43 = arith.subf %39, %42 : vector<2x8xf32>
    %44 = math.exp %43 : vector<2x8xf32>
    %cst_28 = arith.constant dense<0.000000e+00> : vector<2xf32>
    %45 = vector.multi_reduction <add>, %44, %cst_28 [1] : vector<2x8xf32> to vector<2xf32>
    %46 = vector.shape_cast %45 : vector<2xf32> to vector<2x1xf32>
    %47 = tpu.reciprocal %46 : vector<2x1xf32> -> vector<2x1xf32>
    %48 = vector.broadcast %47 : vector<2x1xf32> to vector<2x8xf32>
    %49 = arith.mulf %44, %48 : vector<2x8xf32>
    %50 = vector.shape_cast %49 : vector<2x8xf32> to vector<2x1x8xf32>
    "tpu.trace_start"() <{level = 10 : i32, message = "bqs,bsd->bqd"}> : () -> ()
    %cst_29 = arith.constant dense<0.000000e+00> : vector<2x1x64xf32>
    %51 = tpu.matmul %50, %0, %cst_29 {dimension_numbers = #tpu.dot_dimension_numbers<[2], [1], [1], [2], [0, 0, 0, 1, 1, 2], [0], [0]>} : vector<2x1x8xf32>, vector<2x8x64xf32>, vector<2x1x64xf32> -> vector<2x1x64xf32>
    "tpu.trace_stop"() : () -> ()
    %52 = vector.shape_cast %51 : vector<2x1x64xf32> to vector<2x64xf32>
    %c0_30 = arith.constant 0 : index
    %c0_31 = arith.constant 0 : index
    %53 = vector.load %arg13[%c0_30, %c0_31] : memref<2x64xf32, #tpu.memory_space<vmem>>, vector<2x64xf32>
    tpu.vector_store %arg13[%c0_30, %c0_31], %52 {strides = array<i32>} : memref<2x64xf32, #tpu.memory_space<vmem>>, vector<2x64xf32>,
    %c0_32 = arith.constant 0 : index
    %c0_33 = arith.constant 0 : index
    %54 = vector.load %arg14[%c0_32, %c0_33] : memref<2x8xf32, #tpu.memory_space<vmem>>, vector<2x8xf32>
    tpu.vector_store %arg14[%c0_32, %c0_33], %49 {strides = array<i32>} : memref<2x8xf32, #tpu.memory_space<vmem>>, vector<2x8xf32>,
    %55 = arith.addf %2, %49 : vector<2x8xf32>
    %c0_34 = arith.constant 0 : index
    %c0_35 = arith.constant 0 : index
    %56 = vector.load %arg15[%c0_34, %c0_35] : memref<2x8xf32, #tpu.memory_space<vmem>>, vector<2x8xf32>
    tpu.vector_store %arg15[%c0_34, %c0_35], %55 {strides = array<i32>} : memref<2x8xf32, #tpu.memory_space<vmem>>, vector<2x8xf32>,
    return
  }
  func.func @transform_0(%arg0: i32) -> (i32, i32, i32) {
    %c0_i32 = arith.constant 0 : i32
    %c0_i32_0 = arith.constant 0 : i32
    %c0_i32_1 = arith.constant 0 : i32
    return %arg0, %c0_i32, %c0_i32_0 : i32, i32, i32
  }
  func.func @transform_1(%arg0: i32) -> (i32, i32) {
    %c0_i32 = arith.constant 0 : i32
    %c0_i32_0 = arith.constant 0 : i32
    return %arg0, %c0_i32 : i32, i32
  }
  func.func @transform_2(%arg0: i32) -> (i32, i32) {
    %c0_i32 = arith.constant 0 : i32
    %c0_i32_0 = arith.constant 0 : i32
    return %arg0, %c0_i32 : i32, i32
  }
  func.func @transform_3(%arg0: i32) -> (i32, i32) {
    %c0_i32 = arith.constant 0 : i32
    %c0_i32_0 = arith.constant 0 : i32
    return %arg0, %c0_i32 : i32, i32
  }
  func.func @transform_4(%arg0: i32) -> (i32, i32) {
    %c0_i32 = arith.constant 0 : i32
    %c0_i32_0 = arith.constant 0 : i32
    %c0_i32_1 = arith.constant 0 : i32
    return %c0_i32, %c0_i32_0 : i32, i32
  }
  func.func @transform_5(%arg0: i32) -> (i32, i32) {
    %c0_i32 = arith.constant 0 : i32
    %c0_i32_0 = arith.constant 0 : i32
    %c0_i32_1 = arith.constant 0 : i32
    return %c0_i32, %c0_i32_0 : i32, i32
  }
  func.func @transform_6(%arg0: i32) -> (i32, i32) {
    %c0_i32 = arith.constant 0 : i32
    %c0_i32_0 = arith.constant 0 : i32
    %c0_i32_1 = arith.constant 0 : i32
    return %c0_i32, %c0_i32_0 : i32, i32
  }
  func.func @transform_7(%arg0: i32) -> (i32, i32) {
    %c0_i32 = arith.constant 0 : i32
    %c0_i32_0 = arith.constant 0 : i32
    %c0_i32_1 = arith.constant 0 : i32
    return %c0_i32, %c0_i32_0 : i32, i32
  }
  func.func @transform_8(%arg0: i32) -> (i32, i32) {
    %c0_i32 = arith.constant 0 : i32
    %c0_i32_0 = arith.constant 0 : i32
    %c0_i32_1 = arith.constant 0 : i32
    return %c0_i32, %c0_i32_0 : i32, i32
  }
  func.func @transform_9(%arg0: i32) -> (i32, i32) {
    %c0_i32 = arith.constant 0 : i32
    %c0_i32_0 = arith.constant 0 : i32
    %c0_i32_1 = arith.constant 0 : i32
    return %c0_i32, %c0_i32_0 : i32, i32
  }
  func.func @transform_10(%arg0: i32) -> (i32, i32) {
    %c0_i32 = arith.constant 0 : i32
    %c0_i32_0 = arith.constant 0 : i32
    %c0_i32_1 = arith.constant 0 : i32
    return %c0_i32, %c0_i32_0 : i32, i32
  }
  func.func @transform_11(%arg0: i32) -> i32 {
    %c0_i32 = arith.constant 0 : i32
    %c0_i32_0 = arith.constant 0 : i32
    return %c0_i32 : i32
  }
  func.func @transform_12(%arg0: i32) -> (i32, i32) {
    %c0_i32 = arith.constant 0 : i32
    %c0_i32_0 = arith.constant 0 : i32
    return %arg0, %c0_i32 : i32, i32
  }
  func.func @transform_13(%arg0: i32) -> (i32, i32) {
    %c0_i32 = arith.constant 0 : i32
    %c0_i32_0 = arith.constant 0 : i32
    return %arg0, %c0_i32 : i32, i32
  }
  func.func @transform_14(%arg0: i32) -> (i32, i32) {
    %c0_i32 = arith.constant 0 : i32
    %c0_i32_0 = arith.constant 0 : i32
    return %arg0, %c0_i32 : i32, i32
  }
}

</mosaic_0001>

<llo_original>
// kernel: tpu_custom_call.1
$region0: #{tpu_custom_call.1}
  #allocation0 [shape = 'u32[]', space=smem, size = 0x4, offset = 0x4, fixed_abs, tag = 'smem constant byte address 0x4 - core index']
  #allocation1 [shape = 'u32[72,128]{1,0:T(1,128)}', space=vmem, size = 0x9000, scoped, tag = 'internal scratch']
  #allocation2 [shape = 'f32[1]{0:T(128)S(6)}', space=smem, size = 0x200, scoped, tag = 'scoped memory for tpu_custom_call.1']
  %s0 = inlined_call_operand.vmem [shape: f32[2,8,64], index: 0, kind: input, shape index: {}]
  %s1 = inlined_call_operand.vmem [shape: f32[2,8], index: 1, kind: input, shape index: {}]
  %s2 = inlined_call_operand.vmem [shape: f32[2,32], index: 2, kind: input, shape index: {}]
  %s3 = inlined_call_operand.vmem [shape: f32[2,8], index: 3, kind: input, shape index: {}]
  %s4 = inlined_call_operand.vmem [shape: f32[64,32], index: 4, kind: input, shape index: {}]
  %s5 = inlined_call_operand.vmem [shape: f32[1,32], index: 5, kind: input, shape index: {}]
  %s6 = inlined_call_operand.vmem [shape: f32[32,32], index: 6, kind: input, shape index: {}]
  %s7 = inlined_call_operand.vmem [shape: f32[1,32], index: 7, kind: input, shape index: {}]
  %s8 = inlined_call_operand.vmem [shape: f32[1,32], index: 8, kind: input, shape index: {}]
  %s9 = inlined_call_operand.vmem [shape: f32[1,32], index: 9, kind: input, shape index: {}]
  %s10 = inlined_call_operand.vmem [shape: f32[1,32], index: 10, kind: input, shape index: {}]
  %s11 = inlined_call_operand.<no memory space> [shape: f32[1], index: 11, kind: input, shape index: {}]
  %s12 = inlined_call_operand.hbm [shape: f32[2,64], index: 12, kind: output, shape index: {0}]
  %s13 = inlined_call_operand.hbm [shape: f32[2,8], index: 13, kind: output, shape index: {1}]
  %s14 = inlined_call_operand.hbm [shape: f32[2,8], index: 14, kind: output, shape index: {2}]
  %15 = xla_tuple %s12, %s13, %s14
  %s16 = sld [smem:[#allocation0]]
  $region74: #{tpu_custom_call.1} parent=0
    _
  %s18 = ssub.s32 1, %s16
  %s19 = scalar_select 0, %s18, %s16
  %20 = sst [smem:[#allocation2]] %s11
  $region1: #{tpu_custom_call.1} parent=0
    #allocation3 [shape = 'u8[1024]{0}', space=vmem, size = 0x400, scoped, tag = 'output window, operand 0, single buffered']
    #allocation4 [shape = 's32[1]{0}', space=sflag, size = 0x4, scoped, tag = 'scoped memory for tpu_custom_call.1']
    #allocation5 [shape = 'u8[1024]{0}', space=vmem, size = 0x400, scoped, tag = 'output window, operand 1, single buffered']
    #allocation6 [shape = 's32[1]{0}', space=sflag, size = 0x4, scoped, tag = 'scoped memory for tpu_custom_call.1']
    #allocation7 [shape = 'u8[1024]{0}', space=vmem, size = 0x400, scoped, tag = 'output window, operand 2, single buffered']
    %21 = vsyncpa [#allocation4], 0
    %22 = vsyncpa [#allocation6], 0
    // Predicated region
    $region2: #{tpu_custom_call.1} parent=1 // pred_check
      _
    $region3: #{tpu_custom_call.1} parent=1 // pred_check_branch
      %24 = sbr.rel (0) target = $region5
    $region4: #{tpu_custom_call.1} parent=1 // pred_region
      _
    $region5: #{tpu_custom_call.1} parent=1 // pred_fallthru
      _
    // Predicated region
    $region6: #{tpu_custom_call.1} parent=1 // pred_check
      _
    $region7: #{tpu_custom_call.1} parent=1 // pred_check_branch
      %26 = sbr.rel (0) target = $region9
    $region8: #{tpu_custom_call.1} parent=1 // pred_region
      _
    $region9: #{tpu_custom_call.1} parent=1 // pred_fallthru
      _
    // Predicated region
    $region10: #{tpu_custom_call.1} parent=1 // pred_check
      _
    $region11: #{tpu_custom_call.1} parent=1 // pred_check_branch
      %28 = sbr.rel (0) target = $region13
    $region12: #{tpu_custom_call.1} parent=1 // pred_region
      _
    $region13: #{tpu_custom_call.1} parent=1 // pred_fallthru
      _
    // Predicated region
    $region14: #{tpu_custom_call.1} parent=1 // pred_check
      _
    $region15: #{tpu_custom_call.1} parent=1 // pred_check_branch
      %30 = sbr.rel (0) target = $region17
    $region16: #{tpu_custom_call.1} parent=1 // pred_region
      _
    $region17: #{tpu_custom_call.1} parent=1 // pred_fallthru
      _
    // Predicated region
    $region18: #{tpu_custom_call.1} parent=1 // pred_check
      _
    $region19: #{tpu_custom_call.1} parent=1 // pred_check_branch
      %32 = sbr.rel (0) target = $region21
    $region20: #{tpu_custom_call.1} parent=1 // pred_region
      _
    $region21: #{tpu_custom_call.1} parent=1 // pred_fallthru
      _
    // Predicated region
    $region22: #{tpu_custom_call.1} parent=1 // pred_check
      _
    $region23: #{tpu_custom_call.1} parent=1 // pred_check_branch
      %34 = sbr.rel (0) target = $region25
    $region24: #{tpu_custom_call.1} parent=1 // pred_region
      _
    $region25: #{tpu_custom_call.1} parent=1 // pred_fallthru
      _
    // Predicated region
    $region26: #{tpu_custom_call.1} parent=1 // pred_check
      _
    $region27: #{tpu_custom_call.1} parent=1 // pred_check_branch
      %36 = sbr.rel (0) target = $region29
    $region28: #{tpu_custom_call.1} parent=1 // pred_region
      _
    $region29: #{tpu_custom_call.1} parent=1 // pred_fallthru
      _
    // Predicated region
    $region30: #{tpu_custom_call.1} parent=1 // pred_check
      _
    $region31: #{tpu_custom_call.1} parent=1 // pred_check_branch
      %38 = sbr.rel (0) target = $region33
    $region32: #{tpu_custom_call.1} parent=1 // pred_region
      _
    $region33: #{tpu_custom_call.1} parent=1 // pred_fallthru
      _
    // Predicated region
    $region34: #{tpu_custom_call.1} parent=1 // pred_check
      _
    $region35: #{tpu_custom_call.1} parent=1 // pred_check_branch
      %40 = sbr.rel (0) target = $region37
    $region36: #{tpu_custom_call.1} parent=1 // pred_region
      _
    $region37: #{tpu_custom_call.1} parent=1 // pred_fallthru
      _
    // Predicated region
    $region38: #{tpu_custom_call.1} parent=1 // pred_check
      _
    $region39: #{tpu_custom_call.1} parent=1 // pred_check_branch
      %42 = sbr.rel (0) target = $region41
    $region40: #{tpu_custom_call.1} parent=1 // pred_region
      _
    $region41: #{tpu_custom_call.1} parent=1 // pred_fallthru
      _
    // Predicated region
    $region42: #{tpu_custom_call.1} parent=1 // pred_check
      _
    $region43: #{tpu_custom_call.1} parent=1 // pred_check_branch
      %44 = sbr.rel (0) target = $region45
    $region44: #{tpu_custom_call.1} parent=1 // pred_region
      _
    $region45: #{tpu_custom_call.1} parent=1 // pred_fallthru
      _
    // Predicated region
    $region46: #{tpu_custom_call.1} parent=1 // pred_check
      _
    $region47: #{tpu_custom_call.1} parent=1 // pred_check_branch
      %46 = sbr.rel (0) target = $region49
    $region48: #{tpu_custom_call.1} parent=1 // pred_region
      _
    $region49: #{tpu_custom_call.1} parent=1 // pred_fallthru
      _
    %v47 = vld [vmem:[%s0] sm:$0xff]
    %v48 = vld [vmem:[%s0 + $0x8] sm:$0xff]
    %v49 = vld [vmem:[%s1] sm:$0x3]
    %v50 = vld [vmem:[%s3] sm:$0x3]
    %v51 = vld [vmem:[%s2] sm:$0x3]
    %v52 = vld [vmem:[%s4] sm:$0xff]
    %v53 = vld [vmem:[%s4 + $0x8] sm:$0xff]
    %v54 = vld [vmem:[%s4 + $0x10] sm:$0xff]
    %v55 = vld [vmem:[%s4 + $0x18] sm:$0xff]
    %v56 = vld [vmem:[%s4 + $0x20] sm:$0xff]
    %v57 = vld [vmem:[%s4 + $0x28] sm:$0xff]
    %v58 = vld [vmem:[%s4 + $0x30] sm:$0xff]
    %v59 = vld [vmem:[%s4 + $0x38] sm:$0xff]
    %vm60 = vcmask 523264
    %v62 = vsel %vm60, %v47, 0
    %v65 = vsel %vm60, %v48, 0
    %67 = vmatpush.msra.mxu0 0.0
    %68 = vmatpush.msra.mxu0 0.0
    %69 = vmatpush.msra.mxu0 0.0
    %70 = vmatpush.msra.mxu0 0.0
    %71 = vmatpush.msra.mxu0 0.0
    %72 = vmatpush.msra.mxu0 0.0
    %73 = vmatpush.msra.mxu0 0.0
    %74 = vmatpush.msra.mxu0 0.0
    %75 = vmatpush.msra.mxu0 %v59
    %76 = vmatpush.msra.mxu0 %v58
    %77 = vmatpush.msra.mxu0 %v57
    %78 = vmatpush.msra.mxu0 %v56
    %79 = vmatpush.msra.mxu0 %v55
    %80 = vmatpush.msra.mxu0 %v54
    %81 = vmatpush.msra.mxu0 %v53
    %82 = vmatpush.msra.mxu0 %v52
    %83 = vmatmul.f32.gmra.mxu0 %v62
    %v84 = vpop.f32.mrf.mxu0
    %v85 = vadd.f32 0.0, %v84
    %86 = vmatmul.f32.gmra.mxu0 %v65
    %v87 = vpop.f32.mrf.mxu0
    %v88 = vadd.f32 0.0, %v87
    %89 = vdwg.mxu0
    %v90 = vld [vmem:[%s5] sm:$0x1]
    %v91 = vld [vmem:[%s7] sm:$0x1]
    %v92 = vadd.f32 %v90, %v91
    %v93 = vld [vmem:[%s9] sm:$0x1]
    %v94 = vadd.f32 %v92, %v93
    %v95 = vld [vmem:[%s6] sm:$0xff]
    %v96 = vld [vmem:[%s6 + $0x8] sm:$0xff]
    %v97 = vld [vmem:[%s6 + $0x10] sm:$0xff]
    %v98 = vld [vmem:[%s6 + $0x18] sm:$0xff]
    %v100 = vperm.slane %v94, 0
    %vm102 = vcmask 261120
    %v104 = vsel %vm102, %v51, 0
    %106 = vmatpush.msra.mxu0 0.0
    %107 = vmatpush.msra.mxu0 0.0
    %108 = vmatpush.msra.mxu0 0.0
    %109 = vmatpush.msra.mxu0 0.0
    %110 = vmatpush.msra.mxu0 0.0
    %111 = vmatpush.msra.mxu0 0.0
    %112 = vmatpush.msra.mxu0 0.0
    %113 = vmatpush.msra.mxu0 0.0
    %114 = vmatpush.msra.mxu0 0.0
    %115 = vmatpush.msra.mxu0 0.0
    %116 = vmatpush.msra.mxu0 0.0
    %117 = vmatpush.msra.mxu0 0.0
    %118 = vmatpush.msra.mxu0 %v98
    %119 = vmatpush.msra.mxu0 %v97
    %120 = vmatpush.msra.mxu0 %v96
    %121 = vmatpush.msra.mxu0 %v95
    %122 = vmatmul.f32.gmra.mxu0 %v104
    %v123 = vpop.f32.mrf.mxu0
    %v124 = vadd.f32 %v100, %v123
    %125 = vdwg.mxu0
    %v127 = vrot.slane %v124, 1
    %v128 = vperm.slane %v124, 0
    %v129 = vperm.slane %v127, 0
    %v132 = vadd.f32 %v85, %v128
    %v133 = vadd.f32 %v88, %v129
    %v134 = vperm.slane %v50, 0
    %v135 = vlaneseq
    %v136 = vshrl.u32 %v135, 7
    %138 = vset.pattern.permute.xlu0 %v136
    %139 = vperm.xlu0 %138, %v134
    %v140 = vpop.permute.xlu0 %139
    %v141 = vperm.slane %v50, 1
    %v142 = vlaneseq
    %v143 = vshrl.u32 %v142, 7
    %145 = vset.pattern.permute.xlu0 %v143
    %146 = vperm.xlu0 %145, %v141
    %v147 = vpop.permute.xlu0 %146
    %v148 = vld [vmem:[%s8] sm:$0x1]
    %v150 = vperm.slane %v148, 0
    %v152 = vmul.f32 %v140, %v150
    %v153 = vmul.f32 %v147, %v150
    %v154 = vadd.f32 %v132, %v152
    %v155 = vadd.f32 %v133, %v153
    %v156 = vtanh.pop %v154
    %v157 = vtanh.pop %v155
    %v158 = vld [vmem:[%s10] sm:$0x1]
    %v160 = vperm.slane %v158, 0
    %v162 = vmul.f32 %v156, %v160
    %v163 = vmul.f32 %v157, %v160
    %v164 = vsel %vm102, %v162, 0.0
    %165 = vadd.xlane.f32.xlu0 %v164
    %v166 = vpop.xlane.xlu0 %165
    %v167 = vsel %vm102, %v163, 0.0
    %168 = vadd.xlane.f32.xlu0 %v167
    %v169 = vpop.xlane.xlu0 %168
    %s170 = sld [smem:[#allocation2]]
    %v171 = vstv %s170
    %v172 = vadd.f32 %v166, %v171
    %v173 = vadd.f32 %v169, %v171
    %vm174 = vcmp.gt.f32.partialorder %v49, 0.0
    %v177 = vlaneseq
    %v178 = vand.u32 %v177, 127
    %v179 = vperm.slane %v172, %v178
    %v180 = vperm.slane %v173, %v178
    %vm181 = vcmask 1041409
    %v182 = vsel %vm181, %v180, %v179
    %v184 = vsel %vm174, %v182, -1e+30
    %vm185 = vcmask 58368
    %v186 = vsel %vm185, %v184, -inf
    %187 = vmax.xlane.f32.xlu0 %v186
    %v188 = vpop.xlane.xlu0 %187
    %v189 = vsub.f32 %v184, %v188
    %v190 = vmul.f32 %v189, 1.442695
    %v191 = vpow.pop %v190
    %v192 = vsel %vm185, %v191, 0.0
    %193 = vadd.xlane.f32.xlu0 %v192
    %v194 = vpop.xlane.xlu0 %193
    %v195 = vrcp.pop %v194
    %v196 = vmul.f32 %v194, %v195
    %v197 = vsub.f32 1.0, %v196
    %v198 = vmul.f32 %v195, %v197
    %v199 = vadd.f32 %v195, %v198
    %vm200 = vweird.f32 %v194
    %vm201 = vweird.f32 %v195
    %vm202 = vmor %vm200, %vm201
    %v203 = vsel %vm202, %v195, %v199
    %v204 = vand.u32 2147483647, %v194
    %vm205 = vcmp.eq.f32.partialorder %v204, 8.507059e+37
    %v206 = vand.u32 %v194, 2147483648
    %v207 = vor.u32 1.1754944e-38, %v206
    %v208 = vsel %vm205, %v207, %v203
    %v209 = vmul.f32 %v191, %v208
    %v211 = vrot.slane %v209, 1
    %vm212 = vcmask 64512
    %v213 = vsel %vm212, %v209, 0
    %215 = vmatpush.msra.mxu0 0.0
    %216 = vmatpush.msra.mxu0 0.0
    %217 = vmatpush.msra.mxu0 0.0
    %218 = vmatpush.msra.mxu0 0.0
    %219 = vmatpush.msra.mxu0 0.0
    %220 = vmatpush.msra.mxu0 0.0
    %221 = vmatpush.msra.mxu0 0.0
    %222 = vmatpush.msra.mxu0 0.0
    %223 = vmatpush.msra.mxu0 0.0
    %224 = vmatpush.msra.mxu0 0.0
    %225 = vmatpush.msra.mxu0 0.0
    %226 = vmatpush.msra.mxu0 0.0
    %227 = vmatpush.msra.mxu0 0.0
    %228 = vmatpush.msra.mxu0 0.0
    %229 = vmatpush.msra.mxu0 0.0
    %230 = vmatpush.msra.mxu0 %v47
    %231 = vmatmul.f32.gmra.mxu0 %v213
    %v232 = vpop.f32.mrf.mxu0
    %v233 = vadd.f32 0.0, %v232
    %234 = vdwg.mxu0
    %v235 = vsel %vm212, %v211, 0
    %237 = vmatpush.msra.mxu0 0.0
    %238 = vmatpush.msra.mxu0 0.0
    %239 = vmatpush.msra.mxu0 0.0
    %240 = vmatpush.msra.mxu0 0.0
    %241 = vmatpush.msra.mxu0 0.0
    %242 = vmatpush.msra.mxu0 0.0
    %243 = vmatpush.msra.mxu0 0.0
    %244 = vmatpush.msra.mxu0 0.0
    %245 = vmatpush.msra.mxu0 0.0
    %246 = vmatpush.msra.mxu0 0.0
    %247 = vmatpush.msra.mxu0 0.0
    %248 = vmatpush.msra.mxu0 0.0
    %249 = vmatpush.msra.mxu0 0.0
    %250 = vmatpush.msra.mxu0 0.0
    %251 = vmatpush.msra.mxu0 0.0
    %252 = vmatpush.msra.mxu0 %v48
    %253 = vmatmul.f32.gmra.mxu0 %v235
    %v254 = vpop.f32.mrf.mxu0
    %v255 = vadd.f32 0.0, %v254
    %256 = vdwg.mxu0
    %v259 = vrot.slane %v255, 7
    %v260 = vsel %vm181, %v259, %v233
    %vm262 = vcmask 517120
    %263 = vst.msk [vmem:[#allocation3] sm:$0x3] %vm262, %v260
    %264 = vst.msk [vmem:[#allocation5] sm:$0x3] %vm185, %v209
    %v265 = vadd.f32 %v50, %v209
    %266 = vst.msk [vmem:[#allocation7] sm:$0x3] %vm185, %v265
    // Predicated region
    $region50: #{tpu_custom_call.1} parent=1 // pred_check
      _
    $region51: #{tpu_custom_call.1} parent=1 // pred_check_branch
      %268 = sbr.rel (0) target = $region53
    $region52: #{tpu_custom_call.1} parent=1 // pred_region
      %270 = vsyncadd [#allocation4], 0
      %s272 = sshll.u32 [#allocation3], 4
      %s273 = int_to_ptr.vmem [resolvable:$true] %s272
      %s274 = sshll.u32 %s12, 4
      %s275 = int_to_ptr.hbm [resolvable:$true] %s274
      %277 = dma.vmem_to_hbm [thread:$0]  %s273, 32, %s275, [#allocation4]
    $region53: #{tpu_custom_call.1} parent=1 // pred_fallthru
      _
    // Predicated region
    $region54: #{tpu_custom_call.1} parent=1 // pred_check
      _
    $region55: #{tpu_custom_call.1} parent=1 // pred_check_branch
      %279 = sbr.rel (0) target = $region57
    $region56: #{tpu_custom_call.1} parent=1 // pred_region
      %281 = vsyncadd [#allocation6], 0
      %s283 = sshll.u32 [#allocation5], 4
      %s284 = int_to_ptr.vmem [resolvable:$true] %s283
      %s285 = sshll.u32 %s13, 4
      %s286 = int_to_ptr.hbm [resolvable:$true] %s285
      %288 = dma.vmem_to_hbm [thread:$0]  %s284, 32, %s286, [#allocation6]
    $region57: #{tpu_custom_call.1} parent=1 // pred_fallthru
      _
    // Predicated region
    $region58: #{tpu_custom_call.1} parent=1 // pred_check
      _
    $region59: #{tpu_custom_call.1} parent=1 // pred_check_branch
      %290 = sbr.rel (0) target = $region61
    $region60: #{tpu_custom_call.1} parent=1 // pred_region
      %292 = vsyncadd [#allocation6], 0
      %s294 = sshll.u32 [#allocation7], 4
      %s295 = int_to_ptr.vmem [resolvable:$true] %s294
      %s296 = sshll.u32 %s14, 4
      %s297 = int_to_ptr.hbm [resolvable:$true] %s296
      %299 = dma.vmem_to_hbm [thread:$0]  %s295, 32, %s297, [#allocation6]
    $region61: #{tpu_custom_call.1} parent=1 // pred_fallthru
      _
    // Predicated region
    $region62: #{tpu_custom_call.1} parent=1 // pred_check
      _
    $region63: #{tpu_custom_call.1} parent=1 // pred_check_branch
      %301 = sbr.rel (0) target = $region65
    $region64: #{tpu_custom_call.1} parent=1 // pred_region
      %303 = dma.done [#allocation4], 32
    $region65: #{tpu_custom_call.1} parent=1 // pred_fallthru
      _
    // Predicated region
    $region66: #{tpu_custom_call.1} parent=1 // pred_check
      _
    $region67: #{tpu_custom_call.1} parent=1 // pred_check_branch
      %305 = sbr.rel (0) target = $region69
    $region68: #{tpu_custom_call.1} parent=1 // pred_region
      %307 = dma.done [#allocation6], 32
    $region69: #{tpu_custom_call.1} parent=1 // pred_fallthru
      _
    // Predicated region
    $region70: #{tpu_custom_call.1} parent=1 // pred_check
      _
    $region71: #{tpu_custom_call.1} parent=1 // pred_check_branch
      %309 = sbr.rel (0) target = $region73
    $region72: #{tpu_custom_call.1} parent=1 // pred_region
      %311 = dma.done [#allocation6], 32
    $region73: #{tpu_custom_call.1} parent=1 // pred_fallthru
      _
    %312 = vsyncpa [#allocation4], 1
    %313 = vsyncpa [#allocation6], 1

</llo_original>
